<compile_context>
chip_gen: v7x
topology: tpu7x:2x2x1
jax: 0.10.0
libtpu: 0.0.40
codegen_flags: <defaults>
</compile_context>

<pallas_src>
import jax
import jax.numpy as jnp
from jax.experimental import pallas as pl
from jax.experimental.pallas import tpu as pltpu


def _mbrconv1_fused_kernel(x_ref, w_ref, b_ref, o_ref):
    # x_ref: (BN, C_in, TP)   pixels on the lane axis (lane-dense)
    # w_ref: (C_out, C_in)    fully-folded 1x1 weight (activation dtype)
    # b_ref: (C_out, TP)      fully-folded bias, pre-broadcast across lanes (f32)
    # o_ref: (BN, C_out, TP)
    bn = x_ref.shape[0]
    for b in range(bn):  # static unroll over the (small) in-block batch
        acc = jnp.dot(w_ref[...], x_ref[b],
                      preferred_element_type=jnp.float32)
        o_ref[b] = (acc + b_ref[...]).astype(o_ref.dtype)


def _round_up(x, m):
    return ((x + m - 1) // m) * m


def _round_down_128(x):
    return max(128, (x // 128) * 128)


def mbrconv1_forward(x_nchw, params, *, max_tile_p=2048,
                     vmem_budget_bytes=8 * 1024 * 1024):
    """x_nchw: (N, C_in, H, W), f32 or bf16. Returns (N, C_out, H, W) in x dtype."""
    w1, b1, gamma, beta, run_mean, run_var, eps, w2, b2 = params

    N, C_in, H, W = x_nchw.shape
    M = w1.shape[0]                    # out_ch * rep_scale
    C_out = w2.shape[0]

    # ---- Fold conv1 -> BN -> concat -> conv2 into ONE affine map (f32) ----
    f32 = jnp.float32
    inv_std = 1.0 / jnp.sqrt(run_var.astype(f32) + jnp.asarray(eps, f32))
    scale = gamma.astype(f32) * inv_std                  # (M,)  BN scale
    shift = beta.astype(f32) - run_mean.astype(f32) * scale  # (M,)  BN shift

    w1_t = w1.reshape(M, C_in).astype(f32).T             # (C_in, M)
    w2_t = w2.reshape(C_out, 2 * M).astype(f32).T        # (2M, C_out)
    w2a, w2b = w2_t[:M], w2_t[M:]                        # (M, C_out) each
    w_eff = w2a + scale[:, None] * w2b                   # (M, C_out)
    w_total = w1_t @ w_eff                               # (C_in, C_out)
    b_total = b1.astype(f32) @ w_eff + shift @ w2b + b2.astype(f32)  # (C_out,)

    act_dtype = x_nchw.dtype
    w_k = w_total.T.astype(act_dtype)                    # (C_out, C_in), matmul dtype

    # ---- Channels-on-sublane / pixels-on-lane: NCHW needs NO transpose ----
    HW = H * W
    x_flat = x_nchw.reshape(N, C_in, HW)
    HW128 = _round_up(HW, 128)
    itemsize = jnp.dtype(act_dtype).itemsize

    # Small feature maps: fold the whole batch into one block (fewer, fuller steps).
    fold_batch = (N > 1) and (HW128 <= 4096)
    BN = N if fold_batch else 1

    # VMEM-budget-aware tile: double-buffered x + out blocks plus resident bias.
    bytes_per_lane = 2 * BN * (C_in + C_out) * itemsize + C_out * 4
    tile_budget = _round_down_128(vmem_budget_bytes // max(bytes_per_lane, 1))
    tile_p = _round_down_128(min(max_tile_p, tile_budget, HW128))

    # v7x occupancy: best-effort keep >= 4 parallel grid steps (2 TensorCores).
    def _n_steps(tp):
        return (N // BN) * (-(-HW // tp))
    while _n_steps(tile_p) < 4 and tile_p > 128:
        tile_p = _round_down_128(tile_p // 2)

    # Lane-dense bias tile (resident across the grid; f32 add after f32 accumulate).
    b_k = jnp.broadcast_to(b_total.reshape(C_out, 1), (C_out, tile_p)).astype(f32)

    grid = (N // BN, pl.cdiv(HW, tile_p))   # ragged last pixel tile -> masked writes

    out_flat = pl.pallas_call(
        _mbrconv1_fused_kernel,
        out_shape=jax.ShapeDtypeStruct((N, C_out, HW), act_dtype),
        grid_spec=pltpu.PrefetchScalarGridSpec(
            num_scalar_prefetch=0,
            grid=grid,
            in_specs=[
                pl.BlockSpec((BN, C_in, tile_p), lambda n, p: (n, 0, p)),  # x tile
                pl.BlockSpec((C_out, C_in), lambda n, p: (0, 0)),          # folded W
                pl.BlockSpec((C_out, tile_p), lambda n, p: (0, 0)),        # folded bias
            ],
            out_specs=pl.BlockSpec((BN, C_out, tile_p), lambda n, p: (n, 0, p)),
        ),
        compiler_params=pltpu.CompilerParams(
            dimension_semantics=("parallel", "parallel")),
    )(x_flat, w_k, b_k)

    return out_flat.reshape(N, C_out, H, W)


def make_params(key, in_channels, out_channels, rep_scale=4, dtype=jnp.float32):
    """Deterministic synthetic parameters with the shapes MBRConv1.__init__ implies."""
    M = out_channels * rep_scale
    ks = jax.random.split(key, 8)
    w1 = jax.random.normal(ks[0], (M, in_channels, 1, 1), dtype) * 0.1
    b1 = jax.random.normal(ks[1], (M,), dtype) * 0.1
    gamma = jax.random.normal(ks[2], (M,), dtype) * 0.1 + 1.0
    beta = jax.random.normal(ks[3], (M,), dtype) * 0.1
    run_mean = jax.random.normal(ks[4], (M,), dtype) * 0.1
    run_var = jax.random.uniform(ks[5], (M,), dtype, minval=0.5, maxval=1.5)
    eps = jnp.asarray(1e-5, dtype)
    w2 = jax.random.normal(ks[6], (out_channels, 2 * M, 1, 1), dtype) * 0.1
    b2 = jax.random.normal(ks[7], (out_channels,), dtype) * 0.1
    return (w1, b1, gamma, beta, run_mean, run_var, eps, w2, b2)


def _reference(x_nchw, params):
    """Plain-JAX f32 reference of the PyTorch forward (inference-mode BN), unfused."""
    w1, b1, gamma, beta, run_mean, run_var, eps, w2, b2 = params
    N, C_in, H, W = x_nchw.shape
    M = w1.shape[0]
    C_out = w2.shape[0]
    x = jnp.transpose(x_nchw, (0, 2, 3, 1)).reshape(-1, C_in).astype(jnp.float32)
    x0 = x @ w1.reshape(M, C_in).T + b1
    bn = (x0 - run_mean) / jnp.sqrt(run_var + eps) * gamma + beta
    cat = jnp.concatenate([x0, bn], axis=-1)
    out = cat @ w2.reshape(C_out, 2 * M).T + b2
    return out.reshape(N, H, W, C_out).transpose(0, 3, 1, 2)


if __name__ == "__main__":
    key = jax.random.PRNGKey(0)
    k_x, k_p = jax.random.split(key)

    in_channels, out_channels, rep_scale = 4, 4, 4
    N, H, W = 2, 16, 16

    x = jax.random.normal(k_x, (N, in_channels, H, W), jnp.float32)
    params = make_params(k_p, in_channels, out_channels, rep_scale)

    # f32 activation path (tight tolerance vs. unfused reference)
    out = jax.block_until_ready(mbrconv1_forward(x, params))
    ref = _reference(x, params)
    assert out.shape == (N, out_channels, H, W)
    assert jnp.allclose(out, ref, atol=1e-4, rtol=1e-4), \
        f"f32 max abs err {jnp.max(jnp.abs(out - ref))}"

    # bf16 activation path (HBM-bandwidth optimization; f32 accumulate inside)
    x_bf16 = x.astype(jnp.bfloat16)
    out_bf16 = jax.block_until_ready(mbrconv1_forward(x_bf16, params))
    assert out_bf16.dtype == jnp.bfloat16
    ref_bf16 = _reference(x_bf16.astype(jnp.float32), params)
    bf16_err = jnp.max(jnp.abs(out_bf16.astype(jnp.float32) - ref_bf16))
    assert bf16_err < 5e-2, f"bf16 max abs err {bf16_err}"

    print("KERNEL_OK")
</pallas_src>

<mosaic_0001>
module attributes {stable_mosaic.version = 11 : i64} {
  func.func @_mbrconv1_fused_kernel(%arg0: i32, %arg1: i32, %arg2: memref<2x4x128xf32, #tpu.memory_space<vmem>>, %arg3: memref<4x4xf32, #tpu.memory_space<vmem>>, %arg4: memref<4x128xf32, #tpu.memory_space<vmem>>, %arg5: memref<2x4x128xf32, #tpu.memory_space<vmem>>) attributes {dimension_semantics = [#tpu.dimension_semantics<parallel>, #tpu.dimension_semantics<parallel>], iteration_bounds = array<i64: 1, 2>, scalar_prefetch = 0 : i64, scratch_operands = 0 : i64, tpu.core_type = #tpu.core_type<tc>, window_params = [{transform_indices = @transform_0, window_bounds = array<i64: 2, 4, 128>}, {pipeline_mode = #tpu.pipeline_mode<synchronous>, transform_indices = @transform_1, window_bounds = array<i64: 4, 4>}, {pipeline_mode = #tpu.pipeline_mode<synchronous>, transform_indices = @transform_2, window_bounds = array<i64: 4, 128>}, {transform_indices = @transform_3, window_bounds = array<i64: 2, 4, 128>}]} {
    %c0 = arith.constant 0 : index
    %c0_0 = arith.constant 0 : index
    %0 = vector.load %arg3[%c0, %c0_0] : memref<4x4xf32, #tpu.memory_space<vmem>>, vector<4x4xf32>
    %c0_1 = arith.constant 0 : index
    %c0_2 = arith.constant 0 : index
    %c0_3 = arith.constant 0 : index
    %1 = vector.load %arg2[%c0_1, %c0_2, %c0_3] : memref<2x4x128xf32, #tpu.memory_space<vmem>>, vector<1x4x128xf32>
    %2 = vector.shape_cast %1 : vector<1x4x128xf32> to vector<4x128xf32>
    %cst = arith.constant dense<0.000000e+00> : vector<4x128xf32>
    %3 = tpu.matmul %0, %2, %cst {dimension_numbers = #tpu.dot_dimension_numbers<[1], [0], [0], [1], [0, 0, 1, 1], [], []>} : vector<4x4xf32>, vector<4x128xf32>, vector<4x128xf32> -> vector<4x128xf32>
    %c0_4 = arith.constant 0 : index
    %c0_5 = arith.constant 0 : index
    %4 = vector.load %arg4[%c0_4, %c0_5] : memref<4x128xf32, #tpu.memory_space<vmem>>, vector<4x128xf32>
    %5 = arith.addf %3, %4 : vector<4x128xf32>
    %c0_6 = arith.constant 0 : index
    %c0_7 = arith.constant 0 : index
    %c0_8 = arith.constant 0 : index
    %6 = vector.load %arg5[%c0_6, %c0_7, %c0_8] : memref<2x4x128xf32, #tpu.memory_space<vmem>>, vector<1x4x128xf32>
    %7 = vector.shape_cast %6 : vector<1x4x128xf32> to vector<4x128xf32>
    %8 = vector.shape_cast %5 : vector<4x128xf32> to vector<1x4x128xf32>
    tpu.vector_store %arg5[%c0_6, %c0_7, %c0_8], %8 {strides = array<i32>} : memref<2x4x128xf32, #tpu.memory_space<vmem>>, vector<1x4x128xf32>,
    %c0_9 = arith.constant 0 : index
    %c0_10 = arith.constant 0 : index
    %9 = vector.load %arg3[%c0_9, %c0_10] : memref<4x4xf32, #tpu.memory_space<vmem>>, vector<4x4xf32>
    %c1 = arith.constant 1 : index
    %c0_11 = arith.constant 0 : index
    %c0_12 = arith.constant 0 : index
    %10 = vector.load %arg2[%c1, %c0_11, %c0_12] : memref<2x4x128xf32, #tpu.memory_space<vmem>>, vector<1x4x128xf32>
    %11 = vector.shape_cast %10 : vector<1x4x128xf32> to vector<4x128xf32>
    %cst_13 = arith.constant dense<0.000000e+00> : vector<4x128xf32>
    %12 = tpu.matmul %9, %11, %cst_13 {dimension_numbers = #tpu.dot_dimension_numbers<[1], [0], [0], [1], [0, 0, 1, 1], [], []>} : vector<4x4xf32>, vector<4x128xf32>, vector<4x128xf32> -> vector<4x128xf32>
    %c0_14 = arith.constant 0 : index
    %c0_15 = arith.constant 0 : index
    %13 = vector.load %arg4[%c0_14, %c0_15] : memref<4x128xf32, #tpu.memory_space<vmem>>, vector<4x128xf32>
    %14 = arith.addf %12, %13 : vector<4x128xf32>
    %c1_16 = arith.constant 1 : index
    %c0_17 = arith.constant 0 : index
    %c0_18 = arith.constant 0 : index
    %15 = vector.load %arg5[%c1_16, %c0_17, %c0_18] : memref<2x4x128xf32, #tpu.memory_space<vmem>>, vector<1x4x128xf32>
    %16 = vector.shape_cast %15 : vector<1x4x128xf32> to vector<4x128xf32>
    %17 = vector.shape_cast %14 : vector<4x128xf32> to vector<1x4x128xf32>
    tpu.vector_store %arg5[%c1_16, %c0_17, %c0_18], %17 {strides = array<i32>} : memref<2x4x128xf32, #tpu.memory_space<vmem>>, vector<1x4x128xf32>,
    return
  }
  func.func @transform_0(%arg0: i32, %arg1: i32) -> (i32, i32, i32) {
    %c0_i32 = arith.constant 0 : i32
    %c0_i32_0 = arith.constant 0 : i32
    return %arg0, %c0_i32, %arg1 : i32, i32, i32
  }
  func.func @transform_1(%arg0: i32, %arg1: i32) -> (i32, i32) {
    %c0_i32 = arith.constant 0 : i32
    %c0_i32_0 = arith.constant 0 : i32
    %c0_i32_1 = arith.constant 0 : i32
    return %c0_i32, %c0_i32_0 : i32, i32
  }
  func.func @transform_2(%arg0: i32, %arg1: i32) -> (i32, i32) {
    %c0_i32 = arith.constant 0 : i32
    %c0_i32_0 = arith.constant 0 : i32
    %c0_i32_1 = arith.constant 0 : i32
    return %c0_i32, %c0_i32_0 : i32, i32
  }
  func.func @transform_3(%arg0: i32, %arg1: i32) -> (i32, i32, i32) {
    %c0_i32 = arith.constant 0 : i32
    %c0_i32_0 = arith.constant 0 : i32
    return %arg0, %c0_i32, %arg1 : i32, i32, i32
  }
}

</mosaic_0001>

<llo_original>
// kernel: tpu_custom_call.1
$region0: #{tpu_custom_call.1}
  #allocation0 [shape = 'u32[]', space=smem, size = 0x4, offset = 0x4, fixed_abs, tag = 'smem constant byte address 0x4 - core index']
  #allocation1 [shape = 'u32[144,128]{1,0:T(1,128)}', space=vmem, size = 0x12000, scoped, tag = 'internal scratch']
  %s0 = inlined_call_operand.hbm [shape: f32[2,4,256], index: 0, kind: input, shape index: {}]
  %s1 = inlined_call_operand.hbm [shape: f32[4,4], index: 1, kind: input, shape index: {}]
  %s2 = inlined_call_operand.vmem [shape: f32[4,128], index: 2, kind: input, shape index: {}]
  %s3 = inlined_call_operand.hbm [shape: f32[2,4,256], index: 3, kind: output, shape index: {}]
  %s4 = sld [smem:[#allocation0]]
  $region53: #{tpu_custom_call.1} parent=0
    _
  %s6 = ssub.s32 1, %s4
  %s7 = scalar_select 0, %s6, %s4
  $region1: #{tpu_custom_call.1} parent=0
    #allocation2 [shape = 'u8[8192]{0}', space=vmem, size = 0x2000, scoped, tag = 'input window, operand 0']
    #allocation3 [shape = 's32[2]{0}', space=sflag, size = 0x8, scoped, tag = 'scoped memory for tpu_custom_call.1']
    #allocation4 [shape = 's32[2]{0}', space=sflag, size = 0x8, scoped, tag = 'scoped memory for tpu_custom_call.1']
    #allocation5 [shape = 'u8[2048]{0}', space=vmem, size = 0x800, scoped, tag = 'input window, operand 1, single buffered']
    #allocation6 [shape = 's32[1]{0}', space=sflag, size = 0x4, scoped, tag = 'scoped memory for tpu_custom_call.1']
    #allocation7 [shape = 'u8[8192]{0}', space=vmem, size = 0x2000, scoped, tag = 'output window, operand 0']
    %8 = vsyncpa [#allocation3], 0
    %s9 = scalar_lea.sflag [#allocation3], 1
    %10 = vsyncpa %s9, 0
    %11 = vsyncpa [#allocation6], 0
    %12 = vsyncpa [#allocation4], 0
    %s13 = scalar_lea.sflag [#allocation4], 1
    %14 = vsyncpa %s13, 0
    loop: start=0, step=1, limit=4
    $region2: #{tpu_custom_call.1} parent=1 // loop_pre_header
      _
    $region3: #{tpu_custom_call.1} parent=1 // loop_header
      %s16 = sphi 0, %s20
      %p17 = scmp.ge.s32.totalorder %s16, 4
      %s23 = sphi 0, %s35
      %s24 = sphi 0, %s31
      %s25 = sphi 0, %s23
      %s26 = sphi 0, %s24
      %s27 = sphi 0, %s25
      %s28 = sphi 0, %s26
      %s40 = sphi 0, %s42
      %s43 = sphi 0, %s40
      %s44 = sphi 0, %s43
      %s60 = sphi 0, %s44
      %s64 = sphi 0, %s64
      %s66 = sphi 0, %s64
      %s67 = sphi 0, %s66
      %s81 = sphi 0, %s67
      %s85 = sphi 0, %s85
      %s87 = sphi 0, %s85
      %s88 = sphi 0, %s87
      %s102 = sphi 0, %s88
      %s110 = sphi 0, %s112
      %s113 = sphi 0, %s110
      %s114 = sphi 0, %s113
      %s130 = sphi 0, %s114
    $region4: #{tpu_custom_call.1} parent=1 // loop_header_branch
      %19 = sbr.rel (%p17) target = $region8
    $region5: #{tpu_custom_call.1} parent=1 // loop_body
      %s21 = ssub.s32 %s16, 1
      %s22 = ssub.s32 %s16, 2
      %s29 = sadd.s32 1, %s24
      %p30 = scmp.ge.s32.totalorder %s29, 2
      %s31 = scalar_select %p30, 0, %s29
      %s32 = sadd.s32 1, %s23
      %s33 = scalar_select %p30, %s32, %s23
      %p34 = scmp.ge.s32.totalorder %s33, 1
      %s35 = scalar_select %p34, 0, %s33
      %s36 = ssub.s32 %s23, %s35
      %s37 = ssub.s32 %s24, %s31
      %s38 = sor.u32 %s36, %s37
      %p39 = scmp.eq.s32.totalorder %s38, 0
      %s41 = sadd.s32 %s40, 1
      %s42 = scalar_select %p39, %s40, %s41
      %p45 = pneg %p39
      %p46 = scmp.eq.s32.totalorder %s16, 1
      %p47 = por %p45, %p46
      %p48 = scmp.ne.s32.totalorder %s40, %s43
      %p49 = scmp.eq.s32.totalorder %s16, 0
      %p50 = por %p48, %p49
      %p51 = scmp.ne.s32.totalorder %s40, %s43
      %p52 = scmp.eq.s32.totalorder %s21, 1
      %p53 = por %p51, %p52
      %p54 = scmp.ne.s32.totalorder %s43, %s44
      %p55 = scmp.eq.s32.totalorder %s21, 0
      %p56 = por %p54, %p55
      %p57 = scmp.ne.s32.totalorder %s43, %s44
      %p58 = scmp.eq.s32.totalorder %s22, 1
      %p59 = por %p57, %p58
      %p61 = scmp.ne.s32.totalorder %s44, %s60
      %p62 = scmp.eq.s32.totalorder %s22, 0
      %p63 = por %p61, %p62
      %s65 = sadd.s32 %s64, 1
      %p68 = scmp.eq.s32.totalorder %s16, 1
      %p69 = scmp.ne.s32.totalorder %s64, %s66
      %p70 = scmp.eq.s32.totalorder %s16, 0
      %p71 = por %p69, %p70
      %p72 = scmp.ne.s32.totalorder %s64, %s66
      %p73 = scmp.eq.s32.totalorder %s21, 1
      %p74 = por %p72, %p73
      %p75 = scmp.ne.s32.totalorder %s66, %s67
      %p76 = scmp.eq.s32.totalorder %s21, 0
      %p77 = por %p75, %p76
      %p78 = scmp.ne.s32.totalorder %s66, %s67
      %p79 = scmp.eq.s32.totalorder %s22, 1
      %p80 = por %p78, %p79
      %p82 = scmp.ne.s32.totalorder %s67, %s81
      %p83 = scmp.eq.s32.totalorder %s22, 0
      %p84 = por %p82, %p83
      %s86 = sadd.s32 %s85, 1
      %p89 = scmp.eq.s32.totalorder %s16, 1
      %p90 = scmp.ne.s32.totalorder %s85, %s87
      %p91 = scmp.eq.s32.totalorder %s16, 0
      %p92 = por %p90, %p91
      %p93 = scmp.ne.s32.totalorder %s85, %s87
      %p94 = scmp.eq.s32.totalorder %s21, 1
      %p95 = por %p93, %p94
      %p96 = scmp.ne.s32.totalorder %s87, %s88
      %p97 = scmp.eq.s32.totalorder %s21, 0
      %p98 = por %p96, %p97
      %p99 = scmp.ne.s32.totalorder %s87, %s88
      %p100 = scmp.eq.s32.totalorder %s22, 1
      %p101 = por %p99, %p100
      %p103 = scmp.ne.s32.totalorder %s88, %s102
      %p104 = scmp.eq.s32.totalorder %s22, 0
      %p105 = por %p103, %p104
      %s106 = ssub.s32 %s23, %s35
      %s107 = ssub.s32 %s24, %s31
      %s108 = sor.u32 %s106, %s107
      %p109 = scmp.eq.s32.totalorder %s108, 0
      %s111 = sadd.s32 %s110, 1
      %s112 = scalar_select %p109, %s110, %s111
      %p115 = pneg %p109
      %p116 = scmp.eq.s32.totalorder %s16, 1
      %p117 = por %p115, %p116
      %p118 = scmp.ne.s32.totalorder %s110, %s113
      %p119 = scmp.eq.s32.totalorder %s16, 0
      %p120 = por %p118, %p119
      %p121 = scmp.ne.s32.totalorder %s110, %s113
      %p122 = scmp.eq.s32.totalorder %s21, 1
      %p123 = por %p121, %p122
      %p124 = scmp.ne.s32.totalorder %s113, %s114
      %p125 = scmp.eq.s32.totalorder %s21, 0
      %p126 = por %p124, %p125
      %p127 = scmp.ne.s32.totalorder %s113, %s114
      %p128 = scmp.eq.s32.totalorder %s22, 1
      %p129 = por %p127, %p128
      %p131 = scmp.ne.s32.totalorder %s114, %s130
      %p132 = scmp.eq.s32.totalorder %s22, 0
      %p133 = por %p131, %p132
      %p134 = scmp.le.s32.totalorder 1, %s16
      %p135 = scmp.lt.s32.totalorder %s16, 3
      %p136 = pnand %p134, %p135
      %p137 = pneg %p136
      // Predicated region
      $region9: #{tpu_custom_call.1} parent=5 // pred_check
        _
      $region10: #{tpu_custom_call.1} parent=5 // pred_check_branch
        %139 = sbr.rel (%p136) target = $region12
      $region11: #{tpu_custom_call.1} parent=5 // pred_region
        %s140 = ssub.s32 %s16, 1
        // Predicated region
        $region13: #{tpu_custom_call.1} parent=11 // pred_check
          %p141 = pneg %p77
        $region14: #{tpu_custom_call.1} parent=11 // pred_check_branch
          %143 = sbr.rel (%p141) target = $region16
        $region15: #{tpu_custom_call.1} parent=11 // pred_region
          %s145 = ssub.s32 64, 64
          %146 = vsyncadd [#allocation6], %s145
          %s148 = sshll.u32 [#allocation5], 4
          %s149 = int_to_ptr.vmem [resolvable:$true] %s148
          %151 = dma.hbm_to_vmem [thread:$0]  %s1, 64, %s149, [#allocation6]
        $region16: #{tpu_custom_call.1} parent=11 // pred_fallthru
          _
        // Predicated region
        $region17: #{tpu_custom_call.1} parent=11 // pred_check
          %p152 = pneg %p98
        $region18: #{tpu_custom_call.1} parent=11 // pred_check_branch
          %154 = sbr.rel (%p152) target = $region20
        $region19: #{tpu_custom_call.1} parent=11 // pred_region
          _
        $region20: #{tpu_custom_call.1} parent=11 // pred_fallthru
          _
      $region12: #{tpu_custom_call.1} parent=5 // pred_fallthru
        _
      %p155 = scmp.lt.s32.totalorder %s16, 2
      // Predicated region
      $region21: #{tpu_custom_call.1} parent=5 // pred_check
        %p156 = pneg %p155
      $region22: #{tpu_custom_call.1} parent=5 // pred_check_branch
        %158 = sbr.rel (%p156) target = $region24
      $region23: #{tpu_custom_call.1} parent=5 // pred_region
        // Predicated region
        $region25: #{tpu_custom_call.1} parent=23 // pred_check
          %p159 = pneg %p50
        $region26: #{tpu_custom_call.1} parent=23 // pred_check_branch
          %161 = sbr.rel (%p159) target = $region28
        $region27: #{tpu_custom_call.1} parent=23 // pred_region
          %s162 = sand.u32 %s40, 1
          %s163 = scalar_lea.sflag [#allocation3], %s162
          %s164 = sand.u32 %s40, 1
          %s165 = smul.addr %s164, 8
          %s166 = scalar_lea.vmem [#allocation2], %s165
          %s167 = smul.u32 2, %s23
          %s169 = ssub.s32 128, 128
          %170 = vsyncadd %s163, %s169
          %s171 = smul.addr %s167, 2
          %s172 = sadd.s32 %s24, %s171
          %s173 = smul.addr %s172, 64
          %s174 = scalar_lea.hbm %s0, %s173
          %s175 = sshll.u32 %s166, 4
          %s176 = int_to_ptr.vmem [resolvable:$true] %s175
          %181 = dma.hbm_to_vmem [thread:$0]  %s174, 128, %s176, %s163, 128, 64, 4
        $region28: #{tpu_custom_call.1} parent=23 // pred_fallthru
          _
      $region24: #{tpu_custom_call.1} parent=5 // pred_fallthru
        _
      %p182 = scmp.le.s32.totalorder 1, %s16
      %p183 = scmp.lt.s32.totalorder %s16, 3
      %p184 = pnand %p182, %p183
      %p185 = pneg %p184
      // Predicated region
      $region29: #{tpu_custom_call.1} parent=5 // pred_check
        _
      $region30: #{tpu_custom_call.1} parent=5 // pred_check_branch
        %187 = sbr.rel (%p184) target = $region32
      $region31: #{tpu_custom_call.1} parent=5 // pred_region
        %s188 = ssub.s32 %s16, 1
        %s189 = sand.u32 %s43, 1
        %s190 = scalar_lea.sflag [#allocation3], %s189
        %s191 = sand.u32 %s43, 1
        %s192 = smul.addr %s191, 8
        %s193 = scalar_lea.vmem [#allocation2], %s192
        // Predicated region
        $region33: #{tpu_custom_call.1} parent=31 // pred_check
          %p194 = pneg %p56
        $region34: #{tpu_custom_call.1} parent=31 // pred_check_branch
          %196 = sbr.rel (%p194) target = $region36
        $region35: #{tpu_custom_call.1} parent=31 // pred_region
          %197 = dma.done %s190, 128
        $region36: #{tpu_custom_call.1} parent=31 // pred_fallthru
          _
        // Predicated region
        $region37: #{tpu_custom_call.1} parent=31 // pred_check
          %p198 = pneg %p77
        $region38: #{tpu_custom_call.1} parent=31 // pred_check_branch
          %200 = sbr.rel (%p198) target = $region40
        $region39: #{tpu_custom_call.1} parent=31 // pred_region
          %201 = dma.done [#allocation6], 64
        $region40: #{tpu_custom_call.1} parent=31 // pred_fallthru
          _
        %s202 = sand.u32 %s43, 1
        %s203 = scalar_lea.sflag [#allocation3], %s202
        %s204 = sand.u32 %s43, 1
        %s205 = smul.addr %s204, 8
        %s206 = scalar_lea.vmem [#allocation2], %s205
        %p207 = pneg %p56
        %p208 = pneg %p53
        %p209 = pneg %p77
        %p210 = pneg %p74
        %p211 = pneg %p98
        %p212 = pneg %p95
        %p213 = pneg %p126
        %p214 = pneg %p123
        %s215 = sand.u32 %s113, 1
        %s216 = scalar_lea.sflag [#allocation4], %s215
        %s217 = sand.u32 %s113, 1
        %s218 = smul.addr %s217, 8
        %s219 = scalar_lea.vmem [#allocation7], %s218
        %s220 = smul.u32 2, %s25
        %s221 = smul.u32 2, %s25
        %v222 = vld [vmem:[#allocation5] sm:$0xf]
        %v223 = vld [vmem:[%s193] sm:$0xf]
        %v224 = vld [vmem:[%s2] sm:$0xf]
        %vm225 = vcmask 31744
        %v227 = vsel %vm225, %v222, 0
        %vm229 = vcmask 1043456
        %v231 = vsel %vm229, %v223, 0
        %233 = vmatprep.subr.mxu0 0.0
        %234 = vmatpush1.msra.mxu0 %v231
        %235 = vmatprep.subr.mxu0 0.0
        %236 = vmatpush1.msra.mxu0 0.0
        %237 = vmatprep.subr.mxu0 0.0
        %238 = vmatpush1.msra.mxu0 0.0
        %239 = vmatprep.subr.mxu0 0.0
        %240 = vmatpush1.msra.mxu0 0.0
        %241 = vmatprep.subr.mxu0 0.0
        %242 = vmatpush1.msra.mxu0 0.0
        %243 = vmatprep.subr.mxu0 0.0
        %244 = vmatpush1.msra.mxu0 0.0
        %245 = vmatprep.subr.mxu0 0.0
        %246 = vmatpush1.msra.mxu0 0.0
        %247 = vmatprep.subr.mxu0 0.0
        %248 = vmatpush1.msra.mxu0 0.0
        %249 = vmatprep.subr.mxu0 0.0
        %250 = vmatpush1.msra.mxu0 0.0
        %251 = vmatprep.subr.mxu0 0.0
        %252 = vmatpush1.msra.mxu0 0.0
        %253 = vmatprep.subr.mxu0 0.0
        %254 = vmatpush1.msra.mxu0 0.0
        %255 = vmatprep.subr.mxu0 0.0
        %256 = vmatpush1.msra.mxu0 0.0
        %257 = vmatprep.subr.mxu0 0.0
        %258 = vmatpush1.msra.mxu0 0.0
        %259 = vmatprep.subr.mxu0 0.0
        %260 = vmatpush1.msra.mxu0 0.0
        %261 = vmatprep.subr.mxu0 0.0
        %262 = vmatpush1.msra.mxu0 0.0
        %263 = vmatprep.subr.mxu0 0.0
        %264 = vmatpush1.msra.mxu0 0.0
        %265 = vmatprep.subr.mxu0 0.0
        %266 = vmatpush1.msra.mxu0 0.0
        %267 = vmatprep.subr.mxu0 0.0
        %268 = vmatpush1.msra.mxu0 0.0
        %269 = vmatprep.subr.mxu0 0.0
        %270 = vmatpush1.msra.mxu0 0.0
        %271 = vmatprep.subr.mxu0 0.0
        %272 = vmatpush1.msra.mxu0 0.0
        %273 = vmatprep.subr.mxu0 0.0
        %274 = vmatpush1.msra.mxu0 0.0
        %275 = vmatprep.subr.mxu0 0.0
        %276 = vmatpush1.msra.mxu0 0.0
        %277 = vmatprep.subr.mxu0 0.0
        %278 = vmatpush1.msra.mxu0 0.0
        %279 = vmatprep.subr.mxu0 0.0
        %280 = vmatpush1.msra.mxu0 0.0
        %281 = vmatprep.subr.mxu0 0.0
        %282 = vmatpush1.msra.mxu0 0.0
        %283 = vmatprep.subr.mxu0 0.0
        %284 = vmatpush1.msra.mxu0 0.0
        %285 = vmatprep.subr.mxu0 0.0
        %286 = vmatpush1.msra.mxu0 0.0
        %287 = vmatprep.subr.mxu0 0.0
        %288 = vmatpush1.msra.mxu0 0.0
        %289 = vmatprep.subr.mxu0 0.0
        %290 = vmatpush1.msra.mxu0 0.0
        %291 = vmatprep.subr.mxu0 0.0
        %292 = vmatpush1.msra.mxu0 0.0
        %293 = vmatprep.subr.mxu0 0.0
        %294 = vmatpush1.msra.mxu0 0.0
        %295 = vmatprep.subr.mxu0 0.0
        %296 = vmatpush1.msra.mxu0 0.0
        %297 = vmatprep.mubr.f32.mxu0 0.0
        %298 = vmatmul.mubr.f32.gmra.mrb[0].mxu0 %v227
        %v299 = vpop.f32.mrb[0].mxu0
        %v300 = vadd.f32 %v224, %v299
        %v301 = vpop.f32.mrb[0].mxu0
        %302 = vdwg.mxu0
        %303 = vst [vmem:[%s219] sm:$0xf] %v300
        %v304 = vld [vmem:[#allocation5] sm:$0xf]
        %s305 = scalar_lea.vmem %s193, 4 [#allocation2]
        %v306 = vld [vmem:[%s305] sm:$0xf]
        %v307 = vld [vmem:[%s2] sm:$0xf]
        %v309 = vsel %vm225, %v304, 0
        %v312 = vsel %vm229, %v306, 0
        %314 = vmatprep.subr.mxu0 0.0
        %315 = vmatpush1.msra.mxu0 %v312
        %316 = vmatprep.subr.mxu0 0.0
        %317 = vmatpush1.msra.mxu0 0.0
        %318 = vmatprep.subr.mxu0 0.0
        %319 = vmatpush1.msra.mxu0 0.0
        %320 = vmatprep.subr.mxu0 0.0
        %321 = vmatpush1.msra.mxu0 0.0
        %322 = vmatprep.subr.mxu0 0.0
        %323 = vmatpush1.msra.mxu0 0.0
        %324 = vmatprep.subr.mxu0 0.0
        %325 = vmatpush1.msra.mxu0 0.0
        %326 = vmatprep.subr.mxu0 0.0
        %327 = vmatpush1.msra.mxu0 0.0
        %328 = vmatprep.subr.mxu0 0.0
        %329 = vmatpush1.msra.mxu0 0.0
        %330 = vmatprep.subr.mxu0 0.0
        %331 = vmatpush1.msra.mxu0 0.0
        %332 = vmatprep.subr.mxu0 0.0
        %333 = vmatpush1.msra.mxu0 0.0
        %334 = vmatprep.subr.mxu0 0.0
        %335 = vmatpush1.msra.mxu0 0.0
        %336 = vmatprep.subr.mxu0 0.0
        %337 = vmatpush1.msra.mxu0 0.0
        %338 = vmatprep.subr.mxu0 0.0
        %339 = vmatpush1.msra.mxu0 0.0
        %340 = vmatprep.subr.mxu0 0.0
        %341 = vmatpush1.msra.mxu0 0.0
        %342 = vmatprep.subr.mxu0 0.0
        %343 = vmatpush1.msra.mxu0 0.0
        %344 = vmatprep.subr.mxu0 0.0
        %345 = vmatpush1.msra.mxu0 0.0
        %346 = vmatprep.subr.mxu0 0.0
        %347 = vmatpush1.msra.mxu0 0.0
        %348 = vmatprep.subr.mxu0 0.0
        %349 = vmatpush1.msra.mxu0 0.0
        %350 = vmatprep.subr.mxu0 0.0
        %351 = vmatpush1.msra.mxu0 0.0
        %352 = vmatprep.subr.mxu0 0.0
        %353 = vmatpush1.msra.mxu0 0.0
        %354 = vmatprep.subr.mxu0 0.0
        %355 = vmatpush1.msra.mxu0 0.0
        %356 = vmatprep.subr.mxu0 0.0
        %357 = vmatpush1.msra.mxu0 0.0
        %358 = vmatprep.subr.mxu0 0.0
        %359 = vmatpush1.msra.mxu0 0.0
        %360 = vmatprep.subr.mxu0 0.0
        %361 = vmatpush1.msra.mxu0 0.0
        %362 = vmatprep.subr.mxu0 0.0
        %363 = vmatpush1.msra.mxu0 0.0
        %364 = vmatprep.subr.mxu0 0.0
        %365 = vmatpush1.msra.mxu0 0.0
        %366 = vmatprep.subr.mxu0 0.0
        %367 = vmatpush1.msra.mxu0 0.0
        %368 = vmatprep.subr.mxu0 0.0
        %369 = vmatpush1.msra.mxu0 0.0
        %370 = vmatprep.subr.mxu0 0.0
        %371 = vmatpush1.msra.mxu0 0.0
        %372 = vmatprep.subr.mxu0 0.0
        %373 = vmatpush1.msra.mxu0 0.0
        %374 = vmatprep.subr.mxu0 0.0
        %375 = vmatpush1.msra.mxu0 0.0
        %376 = vmatprep.subr.mxu0 0.0
        %377 = vmatpush1.msra.mxu0 0.0
        %378 = vmatprep.mubr.f32.mxu0 0.0
        %379 = vmatmul.mubr.f32.gmra.mrb[0].mxu0 %v309
        %v380 = vpop.f32.mrb[0].mxu0
        %v381 = vadd.f32 %v307, %v380
        %v382 = vpop.f32.mrb[0].mxu0
        %383 = vdwg.mxu0
        %s384 = scalar_lea.vmem %s219, 4 [#allocation7]
        %385 = vst [vmem:[%s384] sm:$0xf] %v381
        %s386 = sand.u32 %s113, 1
        %s387 = scalar_lea.sflag [#allocation4], %s386
        %s388 = sand.u32 %s113, 1
        %s389 = smul.addr %s388, 8
        %s390 = scalar_lea.vmem [#allocation7], %s389
        // Predicated region
        $region41: #{tpu_custom_call.1} parent=31 // pred_check
          %p391 = pneg %p123
        $region42: #{tpu_custom_call.1} parent=31 // pred_check_branch
          %393 = sbr.rel (%p391) target = $region44
        $region43: #{tpu_custom_call.1} parent=31 // pred_region
          %s394 = smul.u32 2, %s25
          %s396 = ssub.s32 128, 128
          %397 = vsyncadd %s387, %s396
          %s398 = smul.addr %s394, 2
          %s399 = sadd.s32 %s26, %s398
          %s400 = smul.addr %s399, 64
          %s401 = scalar_lea.hbm %s3, %s400
          %s402 = sshll.u32 %s390, 4
          %s403 = int_to_ptr.vmem [resolvable:$true] %s402
          %408 = dma.vmem_to_hbm [thread:$0]  %s403, 128, %s401, %s387, 64, 128, 4
        $region44: #{tpu_custom_call.1} parent=31 // pred_fallthru
          _
      $region32: #{tpu_custom_call.1} parent=5 // pred_fallthru
        _
      %p409 = scmp.le.s32.totalorder 2, %s16
      // Predicated region
      $region45: #{tpu_custom_call.1} parent=5 // pred_check
        %p410 = pneg %p409
      $region46: #{tpu_custom_call.1} parent=5 // pred_check_branch
        %412 = sbr.rel (%p410) target = $region48
      $region47: #{tpu_custom_call.1} parent=5 // pred_region
        %s413 = ssub.s32 %s16, 2
        // Predicated region
        $region49: #{tpu_custom_call.1} parent=47 // pred_check
          %p414 = pneg %p129
        $region50: #{tpu_custom_call.1} parent=47 // pred_check_branch
          %416 = sbr.rel (%p414) target = $region52
        $region51: #{tpu_custom_call.1} parent=47 // pred_region
          %s417 = sand.u32 %s114, 1
          %s418 = scalar_lea.sflag [#allocation4], %s417
          %s419 = sand.u32 %s114, 1
          %s420 = smul.addr %s419, 8
          %s421 = scalar_lea.vmem [#allocation7], %s420
          %422 = dma.done %s418, 128
        $region52: #{tpu_custom_call.1} parent=47 // pred_fallthru
          _
      $region48: #{tpu_custom_call.1} parent=5 // pred_fallthru
        _
    $region6: #{tpu_custom_call.1} parent=1 // loop_footer
      %s20 = sadd.s32 1, %s16
    $region7: #{tpu_custom_call.1} parent=1 // loop_footer_branch
      %15 = sbr.rel target = $region3
    $region8: #{tpu_custom_call.1} parent=1 // loop_exit
      _
    %423 = vsyncpa [#allocation3], 1
    %s424 = scalar_lea.sflag [#allocation3], 1
    %425 = vsyncpa %s424, 1
    %426 = vsyncpa [#allocation6], 1
    %427 = vsyncpa [#allocation4], 1
    %s428 = scalar_lea.sflag [#allocation4], 1
    %429 = vsyncpa %s428, 1

</llo_original>
